<compile_context>
chip_gen: v5e
topology: v5e:2x2
jax: 0.10.0
libtpu: 0.0.40
codegen_flags: <defaults>
</compile_context>

<pallas_src>
import functools

import jax
import jax.numpy as jnp
from jax import lax
from jax.experimental import pallas as pl
from jax.experimental.pallas import tpu as pltpu


# ---------------------------------------------------------------------------
# Fused Pallas kernel (one grid step per batch element)
# ---------------------------------------------------------------------------
def basic_block_kernel(x_ref, vmask_ref, w_ref, slab_ref,
                       o_ref, col_ref, h1pad_ref,
                       *, H, W, Wp, Lp, Cr):
    # x_ref:     (1, C, Lp)   f32  zero-padded input image, flattened per channel
    # vmask_ref: (1, HWe)     f32  1.0 at valid output columns of the extended layout
    # w_ref:     (2, C, 9C)   bf16 tap-merged conv weights  [conv, Cout, k*Cin + ci]
    # slab_ref:  (C, 5+3*Cr)  f32  packed per-channel params (see wrapper)
    # o_ref:     (1, C, HWe)  f32  extended output (H rows of Wp cols, last 2 cols junk)
    # col_ref:   (9C, HWe)    bf16 scratch: stacked shifted activations (VMEM im2col)
    # h1pad_ref: (C, Lp)      bf16 scratch: re-padded h1
    C = o_ref.shape[1]
    HWe = H * Wp                       # extended spatial length
    OFF = Wp + 1                       # flat offset of interior pixel (1, 1)

    x_f32 = x_ref[0]                                   # (C, Lp)
    x_bf16 = x_f32.astype(jnp.bfloat16)
    vmask = vmask_ref[...]                             # (1, HWe)

    # unpack the parameter slab
    s1 = slab_ref[:, 0:1]
    b1 = slab_ref[:, 1:2]
    s2 = slab_ref[:, 2:3]
    b2 = slab_ref[:, 3:4]
    sb2 = slab_ref[:, 4:5]                             # (C, 1)
    sw1 = slab_ref[:, 5:5 + Cr]                        # (C, Cr)  = SE fc1 weight
    sw2 = slab_ref[:, 5 + Cr:5 + 2 * Cr]               # (C, Cr)  = SE fc2 weight^T
    sb1 = slab_ref[0:1, 5 + 2 * Cr:5 + 3 * Cr]         # (1, Cr)  = SE fc1 bias

    taps = [ky * Wp + kx for ky in range(3) for kx in range(3)]

    # ---- conv1 (3x3, pad 1): build im2col once, ONE K=9C MXU dot ------------
    for k, off in enumerate(taps):
        col_ref[k * C:(k + 1) * C, :] = x_bf16[:, off:off + HWe]
    acc1 = jnp.dot(w_ref[0], col_ref[...], preferred_element_type=jnp.float32)
    h1 = jnp.maximum(acc1 * s1 + b1, 0.0)              # (C, HWe) f32, folded BN1 + ReLU

    # ---- re-embed h1 into a zero-padded flat bf16 layout (strip-zero borders)
    h1pad_ref[:, :OFF] = jnp.zeros((C, OFF), jnp.bfloat16)
    h1pad_ref[:, OFF + HWe:] = jnp.zeros((C, Lp - OFF - HWe), jnp.bfloat16)
    h1pad_ref[:, OFF:OFF + HWe] = (h1 * vmask).astype(jnp.bfloat16)
    h1pad = h1pad_ref[...]                             # (C, Lp) bf16

    # ---- conv2 (3x3, pad 1): reuse the same im2col scratch, ONE dot ---------
    for k, off in enumerate(taps):
        col_ref[k * C:(k + 1) * C, :] = h1pad[:, off:off + HWe]
    acc2 = jnp.dot(w_ref[1], col_ref[...], preferred_element_type=jnp.float32)
    h2 = acc2 * s2 + b2                                # (C, HWe) f32, folded BN2 (no ReLU)

    # ---- Squeeze-Excite (f32; no transposes, no MXU needed) -----------------
    pooled = jnp.sum(h2 * vmask, axis=-1, keepdims=True) * (1.0 / (H * W))      # (C, 1)
    z = jnp.maximum(jnp.sum(sw1 * pooled, axis=0, keepdims=True) + sb1, 0.0)     # (1, Cr)
    s = jax.nn.sigmoid(jnp.sum(sw2 * z, axis=1, keepdims=True) + sb2)            # (C, 1)

    # ---- channel scale, residual add (identity = original input), ReLU ------
    identity = x_f32[:, OFF:OFF + HWe]                 # (C, HWe)
    o_ref[0] = jnp.maximum(h2 * s + identity, 0.0)


# ---------------------------------------------------------------------------
# JAX wrapper (layout plumbing only; single pad op, no HBM im2col)
# ---------------------------------------------------------------------------
def basic_block_forward(x_nchw, params):
    """BasicBlock.forward (stride=1, downsample=None), NCHW in -> NCHW out."""
    N, C, H, W = x_nchw.shape
    Wp = W + 2
    Hp = H + 3                     # 1 top + 2 bottom zero rows: shifted reads stay in-bounds
    Lp = Hp * Wp                   # flat padded length per channel
    HWe = H * Wp                   # extended output length per channel
    Cr = params["se_w1"].shape[1]
    NS = 5 + 3 * Cr

    x = x_nchw.astype(jnp.float32)
    # single pad op: zero halo + extra bottom row, then flatten per channel
    x_flat = jnp.pad(x, ((0, 0), (0, 0), (1, 2), (1, 1))).reshape(N, C, Lp)

    # valid-output-column mask of the extended layout (last 2 cols of each row = junk)
    vmask = (jnp.arange(HWe) % Wp < W).astype(jnp.float32)[None, :]          # (1, HWe)

    # tap-merged conv weights: (3,3,Cin,Cout) -> (Cout, 9*Cin), stacked, bf16
    def pack_w(w):
        return jnp.transpose(w, (3, 0, 1, 2)).reshape(C, 9 * C)
    wcat = jnp.stack([pack_w(params["w1"]), pack_w(params["w2"])]).astype(jnp.bfloat16)

    # consolidated per-channel parameter slab (C, NS), f32
    slab = jnp.zeros((C, NS), jnp.float32)
    slab = slab.at[:, 0].set(params["bn1_scale"].reshape(C))
    slab = slab.at[:, 1].set(params["bn1_bias"].reshape(C))
    slab = slab.at[:, 2].set(params["bn2_scale"].reshape(C))
    slab = slab.at[:, 3].set(params["bn2_bias"].reshape(C))
    slab = slab.at[:, 4].set(params["se_b2"].reshape(C))
    slab = slab.at[:, 5:5 + Cr].set(params["se_w1"])                    # (C, Cr)
    slab = slab.at[:, 5 + Cr:5 + 2 * Cr].set(params["se_w2"].T)         # (C, Cr)
    slab = slab.at[0, 5 + 2 * Cr:5 + 3 * Cr].set(params["se_b1"].reshape(Cr))

    kernel = functools.partial(basic_block_kernel, H=H, W=W, Wp=Wp, Lp=Lp, Cr=Cr)
    rep2 = lambda n: (0, 0)

    flops = int(N * (2 * 2 * C * 9 * C * HWe + 8 * C * HWe))
    bytes_accessed = int(N * C * (Lp + HWe) * 4 + wcat.size * 2 + slab.size * 4 + HWe * 4)

    out_ext = pl.pallas_call(
        kernel,
        out_shape=jax.ShapeDtypeStruct((N, C, HWe), jnp.float32),
        grid=(N,),
        in_specs=[
            pl.BlockSpec((1, C, Lp), lambda n: (n, 0, 0)),       # x_flat
            pl.BlockSpec((1, HWe), rep2),                        # vmask
            pl.BlockSpec((2, C, 9 * C), lambda n: (0, 0, 0)),    # tap-merged weights
            pl.BlockSpec((C, NS), rep2),                         # parameter slab
        ],
        out_specs=pl.BlockSpec((1, C, HWe), lambda n: (n, 0, 0)),
        scratch_shapes=[
            pltpu.VMEM((9 * C, HWe), jnp.bfloat16),              # im2col scratch (reused)
            pltpu.VMEM((C, Lp), jnp.bfloat16),                   # re-padded h1
        ],
        compiler_params=pltpu.CompilerParams(dimension_semantics=("parallel",)),
        cost_estimate=pl.CostEstimate(flops=flops,
                                      transcendentals=int(N * C),
                                      bytes_accessed=bytes_accessed),
    )(x_flat, vmask, wcat, slab)

    # drop the 2 junk columns of each extended row -> (N, C, H, W) NCHW
    return out_ext.reshape(N, C, H, Wp)[:, :, :, :W]


# ---------------------------------------------------------------------------
# Parameter construction (deterministic, synthetic)
# ---------------------------------------------------------------------------
def make_params(key, channels, reduction):
    Cr = channels // reduction
    eps = 1e-5
    ks = list(jax.random.split(key, 12))

    def fold_bn(kg, kb, km, kv):
        gamma = 0.5 + jax.random.uniform(kg, (1, channels))
        beta = 0.1 * jax.random.normal(kb, (1, channels))
        mean = 0.1 * jax.random.normal(km, (1, channels))
        var = 0.5 + jax.random.uniform(kv, (1, channels))
        scale = gamma / jnp.sqrt(var + eps)
        bias = beta - mean * scale
        return scale.astype(jnp.float32), bias.astype(jnp.float32)

    w1 = 0.1 * jax.random.normal(ks[0], (3, 3, channels, channels), jnp.float32)
    w2 = 0.1 * jax.random.normal(ks[1], (3, 3, channels, channels), jnp.float32)
    bn1_scale, bn1_bias = fold_bn(ks[2], ks[3], ks[4], ks[5])
    bn2_scale, bn2_bias = fold_bn(ks[6], ks[7], ks[8], ks[9])

    se_w1 = 0.3 * jax.random.normal(ks[10], (channels, Cr), jnp.float32)
    se_b1 = jnp.zeros((1, Cr), jnp.float32) + 0.05
    se_w2 = 0.3 * jax.random.normal(ks[11], (Cr, channels), jnp.float32)
    se_b2 = jnp.zeros((1, channels), jnp.float32) - 0.05

    return {
        "w1": w1, "w2": w2,
        "bn1_scale": bn1_scale, "bn1_bias": bn1_bias,
        "bn2_scale": bn2_scale, "bn2_bias": bn2_bias,
        "se_w1": se_w1, "se_b1": se_b1, "se_w2": se_w2, "se_b2": se_b2,
    }


# ---------------------------------------------------------------------------
# Pure-JAX reference (f32, no Pallas) for correctness check
# ---------------------------------------------------------------------------
def reference_forward(x_nchw, p):
    x = jnp.transpose(x_nchw, (0, 2, 3, 1)).astype(jnp.float32)   # NHWC
    dn = ("NHWC", "HWIO", "NHWC")
    h1 = lax.conv_general_dilated(x, p["w1"], (1, 1), "SAME", dimension_numbers=dn)
    h1 = jnp.maximum(h1 * p["bn1_scale"][0] + p["bn1_bias"][0], 0.0)
    h2 = lax.conv_general_dilated(h1, p["w2"], (1, 1), "SAME", dimension_numbers=dn)
    h2 = h2 * p["bn2_scale"][0] + p["bn2_bias"][0]
    pooled = jnp.mean(h2, axis=(1, 2))                            # (N, C)
    z = jnp.maximum(pooled @ p["se_w1"] + p["se_b1"][0], 0.0)
    s = jax.nn.sigmoid(z @ p["se_w2"] + p["se_b2"][0])            # (N, C)
    out = jnp.maximum(h2 * s[:, None, None, :] + x, 0.0)
    return jnp.transpose(out, (0, 3, 1, 2))


# ---------------------------------------------------------------------------
if __name__ == "__main__":
    # BasicBlock(inplanes=8, planes=8, stride=1, downsample=None, reduction=4)
    N, C, H, W = 2, 8, 16, 16
    key = jax.random.PRNGKey(0)
    kx, kp = jax.random.split(key)
    x = jax.random.normal(kx, (N, C, H, W), jnp.float32)
    params = make_params(kp, channels=C, reduction=4)

    fwd = jax.jit(basic_block_forward)
    out = jax.block_until_ready(fwd(x, params))
    ref = jax.block_until_ready(reference_forward(x, params))

    assert out.shape == (N, C, H, W), out.shape
    # bf16 MXU operands -> tolerance loosened vs the f32 reference.
    err = jnp.abs(out - ref)
    ok = bool(jnp.all(err <= 1e-1 + 1e-2 * jnp.abs(ref)))
    assert ok, f"mismatch vs reference: max abs err = {float(jnp.max(err))}"
    print("KERNEL_OK")
</pallas_src>

<mosaic_0001>
module attributes {stable_mosaic.version = 11 : i64} {
  func.func @basic_block_kernel(%arg0: i32, %arg1: memref<1x8x342xf32, #tpu.memory_space<vmem>>, %arg2: memref<1x288xf32, #tpu.memory_space<vmem>>, %arg3: memref<2x8x72xbf16, #tpu.memory_space<vmem>>, %arg4: memref<8x11xf32, #tpu.memory_space<vmem>>, %arg5: memref<1x8x288xf32, #tpu.memory_space<vmem>>, %arg6: memref<72x288xbf16, #tpu.memory_space<vmem>>, %arg7: memref<8x342xbf16, #tpu.memory_space<vmem>>) attributes {dimension_semantics = [#tpu.dimension_semantics<parallel>], iteration_bounds = array<i64: 2>, scalar_prefetch = 0 : i64, scratch_operands = 2 : i64, tpu.core_type = #tpu.core_type<tc>, window_params = [{transform_indices = @transform_0, window_bounds = array<i64: 1, 8, 342>}, {pipeline_mode = #tpu.pipeline_mode<synchronous>, transform_indices = @transform_1, window_bounds = array<i64: 1, 288>}, {pipeline_mode = #tpu.pipeline_mode<synchronous>, transform_indices = @transform_2, window_bounds = array<i64: 2, 8, 72>}, {pipeline_mode = #tpu.pipeline_mode<synchronous>, transform_indices = @transform_3, window_bounds = array<i64: 8, 11>}, {transform_indices = @transform_4, window_bounds = array<i64: 1, 8, 288>}]} {
    %c0 = arith.constant 0 : index
    %c0_0 = arith.constant 0 : index
    %c0_1 = arith.constant 0 : index
    %0 = vector.load %arg1[%c0, %c0_0, %c0_1] : memref<1x8x342xf32, #tpu.memory_space<vmem>>, vector<1x8x342xf32>
    %1 = vector.shape_cast %0 : vector<1x8x342xf32> to vector<8x342xf32>
    %2 = arith.truncf %1 : vector<8x342xf32> to vector<8x342xbf16>
    %c0_2 = arith.constant 0 : index
    %c0_3 = arith.constant 0 : index
    %3 = vector.load %arg2[%c0_2, %c0_3] : memref<1x288xf32, #tpu.memory_space<vmem>>, vector<1x288xf32>
    %c0_4 = arith.constant 0 : index
    %c0_5 = arith.constant 0 : index
    %4 = vector.load %arg4[%c0_4, %c0_5] : memref<8x11xf32, #tpu.memory_space<vmem>>, vector<8x1xf32>
    %c0_6 = arith.constant 0 : index
    %c1 = arith.constant 1 : index
    %5 = vector.load %arg4[%c0_6, %c1] : memref<8x11xf32, #tpu.memory_space<vmem>>, vector<8x1xf32>
    %c0_7 = arith.constant 0 : index
    %c2 = arith.constant 2 : index
    %6 = vector.load %arg4[%c0_7, %c2] : memref<8x11xf32, #tpu.memory_space<vmem>>, vector<8x1xf32>
    %c0_8 = arith.constant 0 : index
    %c3 = arith.constant 3 : index
    %7 = vector.load %arg4[%c0_8, %c3] : memref<8x11xf32, #tpu.memory_space<vmem>>, vector<8x1xf32>
    %c0_9 = arith.constant 0 : index
    %c4 = arith.constant 4 : index
    %8 = vector.load %arg4[%c0_9, %c4] : memref<8x11xf32, #tpu.memory_space<vmem>>, vector<8x1xf32>
    %c0_10 = arith.constant 0 : index
    %c5 = arith.constant 5 : index
    %9 = vector.load %arg4[%c0_10, %c5] : memref<8x11xf32, #tpu.memory_space<vmem>>, vector<8x2xf32>
    %c0_11 = arith.constant 0 : index
    %c7 = arith.constant 7 : index
    %10 = vector.load %arg4[%c0_11, %c7] : memref<8x11xf32, #tpu.memory_space<vmem>>, vector<8x2xf32>
    %c0_12 = arith.constant 0 : index
    %c9 = arith.constant 9 : index
    %11 = vector.load %arg4[%c0_12, %c9] : memref<8x11xf32, #tpu.memory_space<vmem>>, vector<1x2xf32>
    %12 = vector.extract_strided_slice %2 {offsets = [0, 0], sizes = [8, 288], strides = [1, 1]} : vector<8x342xbf16> to vector<8x288xbf16>
    %c0_13 = arith.constant 0 : index
    %c0_14 = arith.constant 0 : index
    %13 = vector.load %arg6[%c0_13, %c0_14] : memref<72x288xbf16, #tpu.memory_space<vmem>>, vector<8x288xbf16>
    tpu.vector_store %arg6[%c0_13, %c0_14], %12 {strides = array<i32>} : memref<72x288xbf16, #tpu.memory_space<vmem>>, vector<8x288xbf16>,
    %14 = vector.extract_strided_slice %2 {offsets = [0, 1], sizes = [8, 288], strides = [1, 1]} : vector<8x342xbf16> to vector<8x288xbf16>
    %c8 = arith.constant 8 : index
    %c0_15 = arith.constant 0 : index
    %15 = vector.load %arg6[%c8, %c0_15] : memref<72x288xbf16, #tpu.memory_space<vmem>>, vector<8x288xbf16>
    tpu.vector_store %arg6[%c8, %c0_15], %14 {strides = array<i32>} : memref<72x288xbf16, #tpu.memory_space<vmem>>, vector<8x288xbf16>,
    %16 = vector.extract_strided_slice %2 {offsets = [0, 2], sizes = [8, 288], strides = [1, 1]} : vector<8x342xbf16> to vector<8x288xbf16>
    %c16 = arith.constant 16 : index
    %c0_16 = arith.constant 0 : index
    %17 = vector.load %arg6[%c16, %c0_16] : memref<72x288xbf16, #tpu.memory_space<vmem>>, vector<8x288xbf16>
    tpu.vector_store %arg6[%c16, %c0_16], %16 {strides = array<i32>} : memref<72x288xbf16, #tpu.memory_space<vmem>>, vector<8x288xbf16>,
    %18 = vector.extract_strided_slice %2 {offsets = [0, 18], sizes = [8, 288], strides = [1, 1]} : vector<8x342xbf16> to vector<8x288xbf16>
    %c24 = arith.constant 24 : index
    %c0_17 = arith.constant 0 : index
    %19 = vector.load %arg6[%c24, %c0_17] : memref<72x288xbf16, #tpu.memory_space<vmem>>, vector<8x288xbf16>
    tpu.vector_store %arg6[%c24, %c0_17], %18 {strides = array<i32>} : memref<72x288xbf16, #tpu.memory_space<vmem>>, vector<8x288xbf16>,
    %20 = vector.extract_strided_slice %2 {offsets = [0, 19], sizes = [8, 288], strides = [1, 1]} : vector<8x342xbf16> to vector<8x288xbf16>
    %c32 = arith.constant 32 : index
    %c0_18 = arith.constant 0 : index
    %21 = vector.load %arg6[%c32, %c0_18] : memref<72x288xbf16, #tpu.memory_space<vmem>>, vector<8x288xbf16>
    tpu.vector_store %arg6[%c32, %c0_18], %20 {strides = array<i32>} : memref<72x288xbf16, #tpu.memory_space<vmem>>, vector<8x288xbf16>,
    %22 = vector.extract_strided_slice %2 {offsets = [0, 20], sizes = [8, 288], strides = [1, 1]} : vector<8x342xbf16> to vector<8x288xbf16>
    %c40 = arith.constant 40 : index
    %c0_19 = arith.constant 0 : index
    %23 = vector.load %arg6[%c40, %c0_19] : memref<72x288xbf16, #tpu.memory_space<vmem>>, vector<8x288xbf16>
    tpu.vector_store %arg6[%c40, %c0_19], %22 {strides = array<i32>} : memref<72x288xbf16, #tpu.memory_space<vmem>>, vector<8x288xbf16>,
    %24 = vector.extract_strided_slice %2 {offsets = [0, 36], sizes = [8, 288], strides = [1, 1]} : vector<8x342xbf16> to vector<8x288xbf16>
    %c48 = arith.constant 48 : index
    %c0_20 = arith.constant 0 : index
    %25 = vector.load %arg6[%c48, %c0_20] : memref<72x288xbf16, #tpu.memory_space<vmem>>, vector<8x288xbf16>
    tpu.vector_store %arg6[%c48, %c0_20], %24 {strides = array<i32>} : memref<72x288xbf16, #tpu.memory_space<vmem>>, vector<8x288xbf16>,
    %26 = vector.extract_strided_slice %2 {offsets = [0, 37], sizes = [8, 288], strides = [1, 1]} : vector<8x342xbf16> to vector<8x288xbf16>
    %c56 = arith.constant 56 : index
    %c0_21 = arith.constant 0 : index
    %27 = vector.load %arg6[%c56, %c0_21] : memref<72x288xbf16, #tpu.memory_space<vmem>>, vector<8x288xbf16>
    tpu.vector_store %arg6[%c56, %c0_21], %26 {strides = array<i32>} : memref<72x288xbf16, #tpu.memory_space<vmem>>, vector<8x288xbf16>,
    %28 = vector.extract_strided_slice %2 {offsets = [0, 38], sizes = [8, 288], strides = [1, 1]} : vector<8x342xbf16> to vector<8x288xbf16>
    %c64 = arith.constant 64 : index
    %c0_22 = arith.constant 0 : index
    %29 = vector.load %arg6[%c64, %c0_22] : memref<72x288xbf16, #tpu.memory_space<vmem>>, vector<8x288xbf16>
    tpu.vector_store %arg6[%c64, %c0_22], %28 {strides = array<i32>} : memref<72x288xbf16, #tpu.memory_space<vmem>>, vector<8x288xbf16>,
    %c0_23 = arith.constant 0 : index
    %c0_24 = arith.constant 0 : index
    %c0_25 = arith.constant 0 : index
    %30 = vector.load %arg3[%c0_23, %c0_24, %c0_25] : memref<2x8x72xbf16, #tpu.memory_space<vmem>>, vector<1x8x72xbf16>
    %31 = vector.shape_cast %30 : vector<1x8x72xbf16> to vector<8x72xbf16>
    %c0_26 = arith.constant 0 : index
    %c0_27 = arith.constant 0 : index
    %32 = vector.load %arg6[%c0_26, %c0_27] : memref<72x288xbf16, #tpu.memory_space<vmem>>, vector<72x288xbf16>
    %cst = arith.constant dense<0.000000e+00> : vector<8x288xf32>
    %33 = tpu.matmul %31, %32, %cst {dimension_numbers = #tpu.dot_dimension_numbers<[1], [0], [0], [1], [0, 0, 1, 1], [], []>} : vector<8x72xbf16>, vector<72x288xbf16>, vector<8x288xf32> -> vector<8x288xf32>
    %34 = vector.broadcast %4 : vector<8x1xf32> to vector<8x288xf32>
    %35 = arith.mulf %33, %34 : vector<8x288xf32>
    %36 = vector.broadcast %5 : vector<8x1xf32> to vector<8x288xf32>
    %37 = arith.addf %35, %36 : vector<8x288xf32>
    %cst_28 = arith.constant 0.000000e+00 : f32
    %38 = vector.broadcast %cst_28 : f32 to vector<8x288xf32>
    %39 = arith.maximumf %37, %38 : vector<8x288xf32>
    %cst_29 = arith.constant 0.000000e+00 : bf16
    %40 = vector.broadcast %cst_29 : bf16 to vector<8x19xbf16>
    %c0_30 = arith.constant 0 : index
    %c0_31 = arith.constant 0 : index
    %41 = vector.load %arg7[%c0_30, %c0_31] : memref<8x342xbf16, #tpu.memory_space<vmem>>, vector<8x19xbf16>
    tpu.vector_store %arg7[%c0_30, %c0_31], %40 {strides = array<i32>} : memref<8x342xbf16, #tpu.memory_space<vmem>>, vector<8x19xbf16>,
    %cst_32 = arith.constant 0.000000e+00 : bf16
    %42 = vector.broadcast %cst_32 : bf16 to vector<8x35xbf16>
    %c0_33 = arith.constant 0 : index
    %c307 = arith.constant 307 : index
    %43 = vector.load %arg7[%c0_33, %c307] : memref<8x342xbf16, #tpu.memory_space<vmem>>, vector<8x35xbf16>
    tpu.vector_store %arg7[%c0_33, %c307], %42 {strides = array<i32>} : memref<8x342xbf16, #tpu.memory_space<vmem>>, vector<8x35xbf16>,
    %44 = vector.broadcast %3 : vector<1x288xf32> to vector<8x288xf32>
    %45 = arith.mulf %39, %44 : vector<8x288xf32>
    %46 = arith.truncf %45 : vector<8x288xf32> to vector<8x288xbf16>
    %c0_34 = arith.constant 0 : index
    %c19 = arith.constant 19 : index
    %47 = vector.load %arg7[%c0_34, %c19] : memref<8x342xbf16, #tpu.memory_space<vmem>>, vector<8x288xbf16>
    tpu.vector_store %arg7[%c0_34, %c19], %46 {strides = array<i32>} : memref<8x342xbf16, #tpu.memory_space<vmem>>, vector<8x288xbf16>,
    %c0_35 = arith.constant 0 : index
    %c0_36 = arith.constant 0 : index
    %48 = vector.load %arg7[%c0_35, %c0_36] : memref<8x342xbf16, #tpu.memory_space<vmem>>, vector<8x342xbf16>
    %49 = vector.extract_strided_slice %48 {offsets = [0, 0], sizes = [8, 288], strides = [1, 1]} : vector<8x342xbf16> to vector<8x288xbf16>
    %c0_37 = arith.constant 0 : index
    %c0_38 = arith.constant 0 : index
    %50 = vector.load %arg6[%c0_37, %c0_38] : memref<72x288xbf16, #tpu.memory_space<vmem>>, vector<8x288xbf16>
    tpu.vector_store %arg6[%c0_37, %c0_38], %49 {strides = array<i32>} : memref<72x288xbf16, #tpu.memory_space<vmem>>, vector<8x288xbf16>,
    %51 = vector.extract_strided_slice %48 {offsets = [0, 1], sizes = [8, 288], strides = [1, 1]} : vector<8x342xbf16> to vector<8x288xbf16>
    %c8_39 = arith.constant 8 : index
    %c0_40 = arith.constant 0 : index
    %52 = vector.load %arg6[%c8_39, %c0_40] : memref<72x288xbf16, #tpu.memory_space<vmem>>, vector<8x288xbf16>
    tpu.vector_store %arg6[%c8_39, %c0_40], %51 {strides = array<i32>} : memref<72x288xbf16, #tpu.memory_space<vmem>>, vector<8x288xbf16>,
    %53 = vector.extract_strided_slice %48 {offsets = [0, 2], sizes = [8, 288], strides = [1, 1]} : vector<8x342xbf16> to vector<8x288xbf16>
    %c16_41 = arith.constant 16 : index
    %c0_42 = arith.constant 0 : index
    %54 = vector.load %arg6[%c16_41, %c0_42] : memref<72x288xbf16, #tpu.memory_space<vmem>>, vector<8x288xbf16>
    tpu.vector_store %arg6[%c16_41, %c0_42], %53 {strides = array<i32>} : memref<72x288xbf16, #tpu.memory_space<vmem>>, vector<8x288xbf16>,
    %55 = vector.extract_strided_slice %48 {offsets = [0, 18], sizes = [8, 288], strides = [1, 1]} : vector<8x342xbf16> to vector<8x288xbf16>
    %c24_43 = arith.constant 24 : index
    %c0_44 = arith.constant 0 : index
    %56 = vector.load %arg6[%c24_43, %c0_44] : memref<72x288xbf16, #tpu.memory_space<vmem>>, vector<8x288xbf16>
    tpu.vector_store %arg6[%c24_43, %c0_44], %55 {strides = array<i32>} : memref<72x288xbf16, #tpu.memory_space<vmem>>, vector<8x288xbf16>,
    %57 = vector.extract_strided_slice %48 {offsets = [0, 19], sizes = [8, 288], strides = [1, 1]} : vector<8x342xbf16> to vector<8x288xbf16>
    %c32_45 = arith.constant 32 : index
    %c0_46 = arith.constant 0 : index
    %58 = vector.load %arg6[%c32_45, %c0_46] : memref<72x288xbf16, #tpu.memory_space<vmem>>, vector<8x288xbf16>
    tpu.vector_store %arg6[%c32_45, %c0_46], %57 {strides = array<i32>} : memref<72x288xbf16, #tpu.memory_space<vmem>>, vector<8x288xbf16>,
    %59 = vector.extract_strided_slice %48 {offsets = [0, 20], sizes = [8, 288], strides = [1, 1]} : vector<8x342xbf16> to vector<8x288xbf16>
    %c40_47 = arith.constant 40 : index
    %c0_48 = arith.constant 0 : index
    %60 = vector.load %arg6[%c40_47, %c0_48] : memref<72x288xbf16, #tpu.memory_space<vmem>>, vector<8x288xbf16>
    tpu.vector_store %arg6[%c40_47, %c0_48], %59 {strides = array<i32>} : memref<72x288xbf16, #tpu.memory_space<vmem>>, vector<8x288xbf16>,
    %61 = vector.extract_strided_slice %48 {offsets = [0, 36], sizes = [8, 288], strides = [1, 1]} : vector<8x342xbf16> to vector<8x288xbf16>
    %c48_49 = arith.constant 48 : index
    %c0_50 = arith.constant 0 : index
    %62 = vector.load %arg6[%c48_49, %c0_50] : memref<72x288xbf16, #tpu.memory_space<vmem>>, vector<8x288xbf16>
    tpu.vector_store %arg6[%c48_49, %c0_50], %61 {strides = array<i32>} : memref<72x288xbf16, #tpu.memory_space<vmem>>, vector<8x288xbf16>,
    %63 = vector.extract_strided_slice %48 {offsets = [0, 37], sizes = [8, 288], strides = [1, 1]} : vector<8x342xbf16> to vector<8x288xbf16>
    %c56_51 = arith.constant 56 : index
    %c0_52 = arith.constant 0 : index
    %64 = vector.load %arg6[%c56_51, %c0_52] : memref<72x288xbf16, #tpu.memory_space<vmem>>, vector<8x288xbf16>
    tpu.vector_store %arg6[%c56_51, %c0_52], %63 {strides = array<i32>} : memref<72x288xbf16, #tpu.memory_space<vmem>>, vector<8x288xbf16>,
    %65 = vector.extract_strided_slice %48 {offsets = [0, 38], sizes = [8, 288], strides = [1, 1]} : vector<8x342xbf16> to vector<8x288xbf16>
    %c64_53 = arith.constant 64 : index
    %c0_54 = arith.constant 0 : index
    %66 = vector.load %arg6[%c64_53, %c0_54] : memref<72x288xbf16, #tpu.memory_space<vmem>>, vector<8x288xbf16>
    tpu.vector_store %arg6[%c64_53, %c0_54], %65 {strides = array<i32>} : memref<72x288xbf16, #tpu.memory_space<vmem>>, vector<8x288xbf16>,
    %c1_55 = arith.constant 1 : index
    %c0_56 = arith.constant 0 : index
    %c0_57 = arith.constant 0 : index
    %67 = vector.load %arg3[%c1_55, %c0_56, %c0_57] : memref<2x8x72xbf16, #tpu.memory_space<vmem>>, vector<1x8x72xbf16>
    %68 = vector.shape_cast %67 : vector<1x8x72xbf16> to vector<8x72xbf16>
    %c0_58 = arith.constant 0 : index
    %c0_59 = arith.constant 0 : index
    %69 = vector.load %arg6[%c0_58, %c0_59] : memref<72x288xbf16, #tpu.memory_space<vmem>>, vector<72x288xbf16>
    %cst_60 = arith.constant dense<0.000000e+00> : vector<8x288xf32>
    %70 = tpu.matmul %68, %69, %cst_60 {dimension_numbers = #tpu.dot_dimension_numbers<[1], [0], [0], [1], [0, 0, 1, 1], [], []>} : vector<8x72xbf16>, vector<72x288xbf16>, vector<8x288xf32> -> vector<8x288xf32>
    %71 = vector.broadcast %6 : vector<8x1xf32> to vector<8x288xf32>
    %72 = arith.mulf %70, %71 : vector<8x288xf32>
    %73 = vector.broadcast %7 : vector<8x1xf32> to vector<8x288xf32>
    %74 = arith.addf %72, %73 : vector<8x288xf32>
    %75 = vector.broadcast %3 : vector<1x288xf32> to vector<8x288xf32>
    %76 = arith.mulf %74, %75 : vector<8x288xf32>
    %cst_61 = arith.constant dense<0.000000e+00> : vector<8xf32>
    %77 = vector.multi_reduction <add>, %76, %cst_61 [1] : vector<8x288xf32> to vector<8xf32>
    %78 = vector.shape_cast %77 : vector<8xf32> to vector<8x1xf32>
    %cst_62 = arith.constant 3.906250e-03 : f32
    %79 = vector.broadcast %cst_62 : f32 to vector<8x1xf32>
    %80 = arith.mulf %78, %79 : vector<8x1xf32>
    %81 = vector.broadcast %80 : vector<8x1xf32> to vector<8x2xf32>
    %82 = arith.mulf %9, %81 : vector<8x2xf32>
    %cst_63 = arith.constant dense<0.000000e+00> : vector<2xf32>
    %83 = vector.multi_reduction <add>, %82, %cst_63 [0] : vector<8x2xf32> to vector<2xf32>
    %84 = vector.shape_cast %83 : vector<2xf32> to vector<1x2xf32>
    %85 = arith.addf %84, %11 : vector<1x2xf32>
    %cst_64 = arith.constant 0.000000e+00 : f32
    %86 = vector.broadcast %cst_64 : f32 to vector<1x2xf32>
    %87 = arith.maximumf %85, %86 : vector<1x2xf32>
    %88 = vector.broadcast %87 : vector<1x2xf32> to vector<8x2xf32>
    %89 = arith.mulf %10, %88 : vector<8x2xf32>
    %cst_65 = arith.constant dense<0.000000e+00> : vector<8xf32>
    %90 = vector.multi_reduction <add>, %89, %cst_65 [1] : vector<8x2xf32> to vector<8xf32>
    %91 = vector.shape_cast %90 : vector<8xf32> to vector<8x1xf32>
    %92 = arith.addf %91, %8 : vector<8x1xf32>
    %93 = arith.negf %92 : vector<8x1xf32>
    %94 = math.exp %93 : vector<8x1xf32>
    %cst_66 = arith.constant 1.000000e+00 : f32
    %95 = vector.broadcast %cst_66 : f32 to vector<8x1xf32>
    %96 = arith.addf %95, %94 : vector<8x1xf32>
    %97 = arith.divf %95, %96 : vector<8x1xf32>
    %98 = vector.extract_strided_slice %1 {offsets = [0, 19], sizes = [8, 288], strides = [1, 1]} : vector<8x342xf32> to vector<8x288xf32>
    %99 = vector.broadcast %97 : vector<8x1xf32> to vector<8x288xf32>
    %100 = arith.mulf %74, %99 : vector<8x288xf32>
    %101 = arith.addf %100, %98 : vector<8x288xf32>
    %cst_67 = arith.constant 0.000000e+00 : f32
    %102 = vector.broadcast %cst_67 : f32 to vector<8x288xf32>
    %103 = arith.maximumf %101, %102 : vector<8x288xf32>
    %c0_68 = arith.constant 0 : index
    %c0_69 = arith.constant 0 : index
    %c0_70 = arith.constant 0 : index
    %104 = vector.load %arg5[%c0_68, %c0_69, %c0_70] : memref<1x8x288xf32, #tpu.memory_space<vmem>>, vector<1x8x288xf32>
    %105 = vector.shape_cast %104 : vector<1x8x288xf32> to vector<8x288xf32>
    %106 = vector.shape_cast %103 : vector<8x288xf32> to vector<1x8x288xf32>
    tpu.vector_store %arg5[%c0_68, %c0_69, %c0_70], %106 {strides = array<i32>} : memref<1x8x288xf32, #tpu.memory_space<vmem>>, vector<1x8x288xf32>,
    return
  }
  func.func @transform_0(%arg0: i32) -> (i32, i32, i32) {
    %c0_i32 = arith.constant 0 : i32
    %c0_i32_0 = arith.constant 0 : i32
    %c0_i32_1 = arith.constant 0 : i32
    return %arg0, %c0_i32, %c0_i32_0 : i32, i32, i32
  }
  func.func @transform_1(%arg0: i32) -> (i32, i32) {
    %c0_i32 = arith.constant 0 : i32
    %c0_i32_0 = arith.constant 0 : i32
    %c0_i32_1 = arith.constant 0 : i32
    return %c0_i32, %c0_i32_0 : i32, i32
  }
  func.func @transform_2(%arg0: i32) -> (i32, i32, i32) {
    %c0_i32 = arith.constant 0 : i32
    %c0_i32_0 = arith.constant 0 : i32
    %c0_i32_1 = arith.constant 0 : i32
    %c0_i32_2 = arith.constant 0 : i32
    return %c0_i32, %c0_i32_0, %c0_i32_1 : i32, i32, i32
  }
  func.func @transform_3(%arg0: i32) -> (i32, i32) {
    %c0_i32 = arith.constant 0 : i32
    %c0_i32_0 = arith.constant 0 : i32
    %c0_i32_1 = arith.constant 0 : i32
    return %c0_i32, %c0_i32_0 : i32, i32
  }
  func.func @transform_4(%arg0: i32) -> (i32, i32, i32) {
    %c0_i32 = arith.constant 0 : i32
    %c0_i32_0 = arith.constant 0 : i32
    %c0_i32_1 = arith.constant 0 : i32
    return %arg0, %c0_i32, %c0_i32_0 : i32, i32, i32
  }
}

</mosaic_0001>

<llo_original>
// kernel: basic_block_forward.1
$region0: #{basic_block_forward.1}
  #allocation0 [shape = 'u32[]', space=smem, size = 0x4, offset = 0x4, fixed_abs, tag = 'smem constant byte address 0x4 - core index']
  #allocation1 [shape = 'u32[72,128]{1,0:T(1,128)}', space=vmem, size = 0x9000, scoped, tag = 'internal scratch']
  #allocation2 [shape = 'bf16[72,288]{1,0:T(8,128)(2,1)}', space=vmem, size = 0xd800, scoped, tag = 'scratch operand']
  #allocation3 [shape = 'bf16[8,342]{1,0:T(8,128)(2,1)}', space=vmem, size = 0x1800, scoped, tag = 'scratch operand']
  %s0 = inlined_call_operand.vmem [shape: f32[2,8,342], index: 0, kind: input, shape index: {}]
  %s1 = inlined_call_operand.vmem [shape: f32[1,288], index: 1, kind: input, shape index: {}]
  %s2 = inlined_call_operand.vmem [shape: bf16[2,8,72], index: 2, kind: input, shape index: {}]
  %s3 = inlined_call_operand.vmem [shape: f32[8,11], index: 3, kind: input, shape index: {}]
  %s4 = inlined_call_operand.vmem [shape: f32[2,8,288], index: 4, kind: output, shape index: {}]
  %s5 = sld [smem:[#allocation0]]
  $region49: #{basic_block_forward.1} parent=0
    _
  %s7 = ssub.s32 1, %s5
  %s8 = scalar_select 0, %s7, %s5
  loop: start=0, step=1, limit=4
  $region2: #{basic_block_forward.1} parent=0 // loop_pre_header
    _
  $region3: #{basic_block_forward.1} parent=0 // loop_header
    %s10 = sphi 0, %s14
    %p11 = scmp.ge.s32.totalorder %s10, 4
    %s20 = sphi 0, %s22
    %s23 = sphi 0, %s20
    %s24 = sphi 0, %s23
    %s40 = sphi 0, %s24
    %s44 = sphi 0, %s44
    %s46 = sphi 0, %s44
    %s47 = sphi 0, %s46
    %s61 = sphi 0, %s47
    %s65 = sphi 0, %s65
    %s67 = sphi 0, %s65
    %s68 = sphi 0, %s67
    %s82 = sphi 0, %s68
    %s86 = sphi 0, %s86
    %s88 = sphi 0, %s86
    %s89 = sphi 0, %s88
    %s103 = sphi 0, %s89
    %s109 = sphi 0, %s111
    %s112 = sphi 0, %s109
    %s113 = sphi 0, %s112
    %s129 = sphi 0, %s113
  $region4: #{basic_block_forward.1} parent=0 // loop_header_branch
    %13 = sbr.rel (%p11) target = $region8
  $region5: #{basic_block_forward.1} parent=0 // loop_body
    %s15 = ssub.s32 %s10, 1
    %s16 = ssub.s32 %s10, 2
    %s17 = sadd.s32 %s10, 1
    %s18 = ssub.s32 %s10, %s17
    %p19 = scmp.eq.s32.totalorder %s18, 0
    %s21 = sadd.s32 %s20, 1
    %s22 = scalar_select %p19, %s20, %s21
    %p25 = pneg %p19
    %p26 = scmp.eq.s32.totalorder %s10, 1
    %p27 = por %p25, %p26
    %p28 = scmp.ne.s32.totalorder %s20, %s23
    %p29 = scmp.eq.s32.totalorder %s10, 0
    %p30 = por %p28, %p29
    %p31 = scmp.ne.s32.totalorder %s20, %s23
    %p32 = scmp.eq.s32.totalorder %s15, 1
    %p33 = por %p31, %p32
    %p34 = scmp.ne.s32.totalorder %s23, %s24
    %p35 = scmp.eq.s32.totalorder %s15, 0
    %p36 = por %p34, %p35
    %p37 = scmp.ne.s32.totalorder %s23, %s24
    %p38 = scmp.eq.s32.totalorder %s16, 1
    %p39 = por %p37, %p38
    %p41 = scmp.ne.s32.totalorder %s24, %s40
    %p42 = scmp.eq.s32.totalorder %s16, 0
    %p43 = por %p41, %p42
    %s45 = sadd.s32 %s44, 1
    %p48 = scmp.eq.s32.totalorder %s10, 1
    %p49 = scmp.ne.s32.totalorder %s44, %s46
    %p50 = scmp.eq.s32.totalorder %s10, 0
    %p51 = por %p49, %p50
    %p52 = scmp.ne.s32.totalorder %s44, %s46
    %p53 = scmp.eq.s32.totalorder %s15, 1
    %p54 = por %p52, %p53
    %p55 = scmp.ne.s32.totalorder %s46, %s47
    %p56 = scmp.eq.s32.totalorder %s15, 0
    %p57 = por %p55, %p56
    %p58 = scmp.ne.s32.totalorder %s46, %s47
    %p59 = scmp.eq.s32.totalorder %s16, 1
    %p60 = por %p58, %p59
    %p62 = scmp.ne.s32.totalorder %s47, %s61
    %p63 = scmp.eq.s32.totalorder %s16, 0
    %p64 = por %p62, %p63
    %s66 = sadd.s32 %s65, 1
    %p69 = scmp.eq.s32.totalorder %s10, 1
    %p70 = scmp.ne.s32.totalorder %s65, %s67
    %p71 = scmp.eq.s32.totalorder %s10, 0
    %p72 = por %p70, %p71
    %p73 = scmp.ne.s32.totalorder %s65, %s67
    %p74 = scmp.eq.s32.totalorder %s15, 1
    %p75 = por %p73, %p74
    %p76 = scmp.ne.s32.totalorder %s67, %s68
    %p77 = scmp.eq.s32.totalorder %s15, 0
    %p78 = por %p76, %p77
    %p79 = scmp.ne.s32.totalorder %s67, %s68
    %p80 = scmp.eq.s32.totalorder %s16, 1
    %p81 = por %p79, %p80
    %p83 = scmp.ne.s32.totalorder %s68, %s82
    %p84 = scmp.eq.s32.totalorder %s16, 0
    %p85 = por %p83, %p84
    %s87 = sadd.s32 %s86, 1
    %p90 = scmp.eq.s32.totalorder %s10, 1
    %p91 = scmp.ne.s32.totalorder %s86, %s88
    %p92 = scmp.eq.s32.totalorder %s10, 0
    %p93 = por %p91, %p92
    %p94 = scmp.ne.s32.totalorder %s86, %s88
    %p95 = scmp.eq.s32.totalorder %s15, 1
    %p96 = por %p94, %p95
    %p97 = scmp.ne.s32.totalorder %s88, %s89
    %p98 = scmp.eq.s32.totalorder %s15, 0
    %p99 = por %p97, %p98
    %p100 = scmp.ne.s32.totalorder %s88, %s89
    %p101 = scmp.eq.s32.totalorder %s16, 1
    %p102 = por %p100, %p101
    %p104 = scmp.ne.s32.totalorder %s89, %s103
    %p105 = scmp.eq.s32.totalorder %s16, 0
    %p106 = por %p104, %p105
    %s107 = ssub.s32 %s10, %s17
    %p108 = scmp.eq.s32.totalorder %s107, 0
    %s110 = sadd.s32 %s109, 1
    %s111 = scalar_select %p108, %s109, %s110
    %p114 = pneg %p108
    %p115 = scmp.eq.s32.totalorder %s10, 1
    %p116 = por %p114, %p115
    %p117 = scmp.ne.s32.totalorder %s109, %s112
    %p118 = scmp.eq.s32.totalorder %s10, 0
    %p119 = por %p117, %p118
    %p120 = scmp.ne.s32.totalorder %s109, %s112
    %p121 = scmp.eq.s32.totalorder %s15, 1
    %p122 = por %p120, %p121
    %p123 = scmp.ne.s32.totalorder %s112, %s113
    %p124 = scmp.eq.s32.totalorder %s15, 0
    %p125 = por %p123, %p124
    %p126 = scmp.ne.s32.totalorder %s112, %s113
    %p127 = scmp.eq.s32.totalorder %s16, 1
    %p128 = por %p126, %p127
    %p130 = scmp.ne.s32.totalorder %s113, %s129
    %p131 = scmp.eq.s32.totalorder %s16, 0
    %p132 = por %p130, %p131
    %p133 = scmp.le.s32.totalorder 1, %s10
    %p134 = scmp.lt.s32.totalorder %s10, 3
    %p135 = pnand %p133, %p134
    %p136 = pneg %p135
    // Predicated region
    $region9: #{basic_block_forward.1} parent=5 // pred_check
      _
    $region10: #{basic_block_forward.1} parent=5 // pred_check_branch
      %138 = sbr.rel (%p135) target = $region12
    $region11: #{basic_block_forward.1} parent=5 // pred_region
      %s139 = ssub.s32 %s10, 1
      // Predicated region
      $region13: #{basic_block_forward.1} parent=11 // pred_check
        %p140 = pneg %p57
      $region14: #{basic_block_forward.1} parent=11 // pred_check_branch
        %142 = sbr.rel (%p140) target = $region16
      $region15: #{basic_block_forward.1} parent=11 // pred_region
        _
      $region16: #{basic_block_forward.1} parent=11 // pred_fallthru
        _
      // Predicated region
      $region17: #{basic_block_forward.1} parent=11 // pred_check
        %p143 = pneg %p78
      $region18: #{basic_block_forward.1} parent=11 // pred_check_branch
        %145 = sbr.rel (%p143) target = $region20
      $region19: #{basic_block_forward.1} parent=11 // pred_region
        _
      $region20: #{basic_block_forward.1} parent=11 // pred_fallthru
        _
      // Predicated region
      $region21: #{basic_block_forward.1} parent=11 // pred_check
        %p146 = pneg %p99
      $region22: #{basic_block_forward.1} parent=11 // pred_check_branch
        %148 = sbr.rel (%p146) target = $region24
      $region23: #{basic_block_forward.1} parent=11 // pred_region
        _
      $region24: #{basic_block_forward.1} parent=11 // pred_fallthru
        _
    $region12: #{basic_block_forward.1} parent=5 // pred_fallthru
      _
    %p149 = scmp.lt.s32.totalorder %s10, 2
    // Predicated region
    $region25: #{basic_block_forward.1} parent=5 // pred_check
      %p150 = pneg %p149
    $region26: #{basic_block_forward.1} parent=5 // pred_check_branch
      %152 = sbr.rel (%p150) target = $region28
    $region27: #{basic_block_forward.1} parent=5 // pred_region
      // Predicated region
      $region29: #{basic_block_forward.1} parent=27 // pred_check
        %p153 = pneg %p30
      $region30: #{basic_block_forward.1} parent=27 // pred_check_branch
        %155 = sbr.rel (%p153) target = $region32
      $region31: #{basic_block_forward.1} parent=27 // pred_region
        %p156 = scmp.lt.s32.totalorder %s10, 1
        %s157 = scalar_select %p156, %s10, 1
        %s158 = smul.addr %s157, 3
        %s159 = smul.addr %s158, 8
        %s160 = scalar_lea.vmem %s0, %s159
      $region32: #{basic_block_forward.1} parent=27 // pred_fallthru
        _
    $region28: #{basic_block_forward.1} parent=5 // pred_fallthru
      _
    %p161 = scmp.le.s32.totalorder 1, %s10
    %p162 = scmp.lt.s32.totalorder %s10, 3
    %p163 = pnand %p161, %p162
    %p164 = pneg %p163
    // Predicated region
    $region33: #{basic_block_forward.1} parent=5 // pred_check
      _
    $region34: #{basic_block_forward.1} parent=5 // pred_check_branch
      %166 = sbr.rel (%p163) target = $region36
    $region35: #{basic_block_forward.1} parent=5 // pred_region
      %s167 = ssub.s32 %s10, 1
      %p168 = scmp.lt.s32.totalorder %s15, 1
      %s169 = scalar_select %p168, %s15, 1
      %s170 = smul.addr %s169, 3
      %s171 = smul.addr %s170, 8
      %s172 = scalar_lea.vmem %s0, %s171
      %p173 = pneg %p36
      %p174 = pneg %p33
      %p175 = pneg %p57
      %p176 = pneg %p54
      %p177 = pneg %p78
      %p178 = pneg %p75
      %p179 = pneg %p99
      %p180 = pneg %p96
      %p181 = pneg %p125
      %p182 = pneg %p122
      %p183 = scmp.lt.s32.totalorder %s15, 1
      %s184 = scalar_select %p183, %s15, 1
      %s185 = smul.addr %s184, 3
      %s186 = smul.addr %s185, 8
      %s187 = scalar_lea.vmem %s4, %s186
      %p188 = scmp.lt.s32.totalorder %s15, 1
      %s189 = scalar_select %p188, %s15, 1
      %s190 = smul.addr %s189, 3
      %s191 = smul.addr %s190, 8
      %s192 = scalar_lea.vmem %s0, %s191
      %p193 = scmp.lt.s32.totalorder %s15, 1
      %s194 = scalar_select %p193, %s15, 1
      %s195 = smul.addr %s194, 3
      %s196 = smul.addr %s195, 8
      %s197 = scalar_lea.vmem %s4, %s196
      %v199 = vld [vmem:[%s192] sm:$0xff]
      %v200 = vld [vmem:[%s192 + $0x8] sm:$0xff]
      %v201 = vld [vmem:[%s192 + $0x10] sm:$0xff]
      %v202 = vpack.c.bf16 %v200, %v199
      %v203 = vpack.c.bf16 %v201, %v201
      %v204 = vld [vmem:[%s1] sm:$0x7]
      %v205 = vld [vmem:[%s3] sm:$0xff]
      %v206 = vld [vmem:[%s3] sm:$0x1]
      %207 = vst [vmem:[#allocation2] sm:$0xff] %v202
      %vm208 = vcmask 257024
      %209 = vst.msk [vmem:[#allocation2 + $0x8] sm:$0xf] %vm208, %v203
      %212 = vrot.lane.b32.xlu0 %v202, 127
      %v213 = vpop.permute.xlu0 %212
      %214 = vrot.lane.b32.xlu0 %v203, 127
      %v215 = vpop.permute.xlu0 %214
      %v216 = vrot.slane %v213, 4
      %v217 = vrot.slane %v215, 4
      %vm218 = vcmask 1043456
      %v219 = vsel %vm218, %v216, %v217
      %vm220 = vcmask 1039360
      %v221 = vsel %vm220, %v213, %v219
      %224 = vst [vmem:[#allocation2 + $0xc] sm:$0xff] %v221
      %225 = vst.msk [vmem:[#allocation2 + $0x14] sm:$0xf] %vm208, %v215
      %226 = vrot.lane.b32.xlu0 %v202, 126
      %v227 = vpop.permute.xlu0 %226
      %228 = vrot.lane.b32.xlu0 %v203, 126
      %v229 = vpop.permute.xlu0 %228
      %v230 = vrot.slane %v227, 4
      %v231 = vrot.slane %v229, 4
      %v232 = vsel %vm218, %v230, %v231
      %vm233 = vcmask 1031168
      %v234 = vsel %vm233, %v227, %v232
      %237 = vst [vmem:[#allocation2 + $0x18] sm:$0xff] %v234
      %238 = vst.msk [vmem:[#allocation2 + $0x20] sm:$0xf] %vm208, %v229
      %239 = vrot.lane.b32.xlu0 %v202, 110
      %v240 = vpop.permute.xlu0 %239
      %241 = vrot.lane.b32.xlu0 %v203, 110
      %v242 = vpop.permute.xlu0 %241
      %v243 = vrot.slane %v240, 4
      %v244 = vrot.slane %v242, 4
      %v245 = vsel %vm218, %v243, %v244
      %vm246 = vcmask 900096
      %v247 = vsel %vm246, %v240, %v245
      %250 = vst [vmem:[#allocation2 + $0x24] sm:$0xff] %v247
      %251 = vst.msk [vmem:[#allocation2 + $0x2c] sm:$0xf] %vm208, %v242
      %252 = vrot.lane.b32.xlu0 %v202, 109
      %v253 = vpop.permute.xlu0 %252
      %254 = vrot.lane.b32.xlu0 %v203, 109
      %v255 = vpop.permute.xlu0 %254
      %v256 = vrot.slane %v253, 4
      %v257 = vrot.slane %v255, 4
      %v258 = vsel %vm218, %v256, %v257
      %vm259 = vcmask 891904
      %v260 = vsel %vm259, %v253, %v258
      %263 = vst [vmem:[#allocation2 + $0x30] sm:$0xff] %v260
      %264 = vst.msk [vmem:[#allocation2 + $0x38] sm:$0xf] %vm208, %v255
      %265 = vrot.lane.b32.xlu0 %v202, 108
      %v266 = vpop.permute.xlu0 %265
      %267 = vrot.lane.b32.xlu0 %v203, 108
      %v268 = vpop.permute.xlu0 %267
      %v269 = vrot.slane %v266, 4
      %v270 = vrot.slane %v268, 4
      %v271 = vsel %vm218, %v269, %v270
      %vm272 = vcmask 883712
      %v273 = vsel %vm272, %v266, %v271
      %276 = vst [vmem:[#allocation2 + $0x3c] sm:$0xff] %v273
      %277 = vst.msk [vmem:[#allocation2 + $0x44] sm:$0xf] %vm208, %v268
      %278 = vrot.lane.b32.xlu0 %v202, 92
      %v279 = vpop.permute.xlu0 %278
      %280 = vrot.lane.b32.xlu0 %v203, 92
      %v281 = vpop.permute.xlu0 %280
      %v282 = vrot.slane %v279, 4
      %v283 = vrot.slane %v281, 4
      %v284 = vsel %vm218, %v282, %v283
      %vm285 = vcmask 752640
      %v286 = vsel %vm285, %v279, %v284
      %289 = vst [vmem:[#allocation2 + $0x48] sm:$0xff] %v286
      %290 = vst.msk [vmem:[#allocation2 + $0x50] sm:$0xf] %vm208, %v281
      %291 = vrot.lane.b32.xlu0 %v202, 91
      %v292 = vpop.permute.xlu0 %291
      %293 = vrot.lane.b32.xlu0 %v203, 91
      %v294 = vpop.permute.xlu0 %293
      %v295 = vrot.slane %v292, 4
      %v296 = vrot.slane %v294, 4
      %v297 = vsel %vm218, %v295, %v296
      %vm298 = vcmask 744448
      %v299 = vsel %vm298, %v292, %v297
      %302 = vst [vmem:[#allocation2 + $0x54] sm:$0xff] %v299
      %303 = vst.msk [vmem:[#allocation2 + $0x5c] sm:$0xf] %vm208, %v294
      %304 = vrot.lane.b32.xlu0 %v202, 90
      %v305 = vpop.permute.xlu0 %304
      %306 = vrot.lane.b32.xlu0 %v203, 90
      %v307 = vpop.permute.xlu0 %306
      %v308 = vrot.slane %v305, 4
      %v309 = vrot.slane %v307, 4
      %v310 = vsel %vm218, %v308, %v309
      %vm311 = vcmask 736256
      %v312 = vsel %vm311, %v305, %v310
      %315 = vst [vmem:[#allocation2 + $0x60] sm:$0xff] %v312
      %316 = vst.msk [vmem:[#allocation2 + $0x68] sm:$0xf] %vm208, %v307
      %v317 = vld [vmem:[%s2] sm:$0xf]
      %v318 = vld [vmem:[#allocation2] sm:$0xff]
      %v319 = vld [vmem:[#allocation2 + $0x8] sm:$0xf]
      %v320 = vld [vmem:[#allocation2 + $0xc] sm:$0xff]
      %v321 = vld [vmem:[#allocation2 + $0x14] sm:$0xf]
      %v322 = vld [vmem:[#allocation2 + $0x18] sm:$0xff]
      %v323 = vld [vmem:[#allocation2 + $0x20] sm:$0xf]
      %v324 = vld [vmem:[#allocation2 + $0x24] sm:$0xff]
      %v325 = vld [vmem:[#allocation2 + $0x2c] sm:$0xf]
      %v326 = vld [vmem:[#allocation2 + $0x30] sm:$0xff]
      %v327 = vld [vmem:[#allocation2 + $0x38] sm:$0xf]
      %v328 = vld [vmem:[#allocation2 + $0x3c] sm:$0xff]
      %v329 = vld [vmem:[#allocation2 + $0x44] sm:$0xf]
      %v330 = vld [vmem:[#allocation2 + $0x48] sm:$0xff]
      %v331 = vld [vmem:[#allocation2 + $0x50] sm:$0xf]
      %v332 = vld [vmem:[#allocation2 + $0x54] sm:$0xff]
      %v333 = vld [vmem:[#allocation2 + $0x5c] sm:$0xf]
      %v334 = vld [vmem:[#allocation2 + $0x60] sm:$0xff]
      %v335 = vld [vmem:[#allocation2 + $0x68] sm:$0xf]
      %v354 = vunpack.c.l.b16 %v318
      %v355 = vunpack.c.h.b16 %v318
      %v356 = vunpack.c.l.b16 %v319
      %v357 = vunpack.c.l.b16 %v320
      %v358 = vunpack.c.h.b16 %v320
      %v359 = vunpack.c.l.b16 %v321
      %v360 = vunpack.c.l.b16 %v322
      %v361 = vunpack.c.h.b16 %v322
      %v362 = vunpack.c.l.b16 %v323
      %v363 = vunpack.c.l.b16 %v324
      %v364 = vunpack.c.h.b16 %v324
      %v365 = vunpack.c.l.b16 %v325
      %v366 = vunpack.c.l.b16 %v326
      %v367 = vunpack.c.h.b16 %v326
      %v368 = vunpack.c.l.b16 %v327
      %v369 = vunpack.c.l.b16 %v328
      %v370 = vunpack.c.h.b16 %v328
      %v371 = vunpack.c.l.b16 %v329
      %v372 = vunpack.c.l.b16 %v330
      %v373 = vunpack.c.h.b16 %v330
      %v374 = vunpack.c.l.b16 %v331
      %v375 = vunpack.c.l.b16 %v332
      %v376 = vunpack.c.h.b16 %v332
      %v377 = vunpack.c.l.b16 %v333
      %v378 = vunpack.c.l.b16 %v334
      %v379 = vunpack.c.h.b16 %v334
      %v380 = vunpack.c.l.b16 %v335
      %v381 = vpack.c.b16 %v357, %v354
      %v382 = vpack.c.b16 %v358, %v355
      %v383 = vpack.c.b16 %v359, %v356
      %v384 = vpack.c.b16 %v363, %v360
      %v385 = vpack.c.b16 %v364, %v361
      %v386 = vpack.c.b16 %v365, %v362
      %v387 = vpack.c.b16 %v369, %v366
      %v388 = vpack.c.b16 %v370, %v367
      %v389 = vpack.c.b16 %v371, %v368
      %v390 = vpack.c.b16 %v375, %v372
      %v391 = vpack.c.b16 %v376, %v373
      %v392 = vpack.c.b16 %v377, %v374
      %v393 = vpack.c.b16 %v378, %v378
      %v394 = vpack.c.b16 %v379, %v379
      %v395 = vpack.c.b16 %v380, %v380
      %vm408 = vcmask 588800
      %v410 = vsel %vm408, %v317, 0
      %vm412 = vcmask 1043456
      %v414 = vsel %vm412, %v393, 0
      %v417 = vsel %vm412, %v394, 0
      %v420 = vsel %vm412, %v395, 0
      %422 = vmatpush.bf16.msra.mxu0 0
      %423 = vmatpush.bf16.msra.mxu0 0
      %424 = vmatpush.bf16.msra.mxu0 0
      %425 = vmatpush.bf16.msra.mxu0 %v414
      %426 = vmatpush.bf16.msra.mxu0 %v390
      %427 = vmatpush.bf16.msra.mxu0 %v387
      %428 = vmatpush.bf16.msra.mxu0 %v384
      %429 = vmatpush.bf16.msra.mxu0 %v381
      %430 = vmatmul.bf16.gmra.mxu0 %v410
      %v431 = vpop.f32.mrf.mxu0
      %v432 = vadd.f32 0.0, %v431
      %v433 = vpop.f32.mrf.mxu0
      %434 = vdwg.mxu0
      %435 = vmatpush.bf16.msra.mxu0 0
      %436 = vmatpush.bf16.msra.mxu0 0
      %437 = vmatpush.bf16.msra.mxu0 0
      %438 = vmatpush.bf16.msra.mxu0 %v417
      %439 = vmatpush.bf16.msra.mxu0 %v391
      %440 = vmatpush.bf16.msra.mxu0 %v388
      %441 = vmatpush.bf16.msra.mxu0 %v385
      %442 = vmatpush.bf16.msra.mxu0 %v382
      %443 = vmatmul.bf16.gmra.mxu0 %v410
      %v444 = vpop.f32.mrf.mxu0
      %v445 = vadd.f32 0.0, %v444
      %v446 = vpop.f32.mrf.mxu0
      %447 = vdwg.mxu0
      %448 = vmatpush.bf16.msra.mxu0 0
      %449 = vmatpush.bf16.msra.mxu0 0
      %450 = vmatpush.bf16.msra.mxu0 0
      %451 = vmatpush.bf16.msra.mxu0 %v420
      %452 = vmatpush.bf16.msra.mxu0 %v392
      %453 = vmatpush.bf16.msra.mxu0 %v389
      %454 = vmatpush.bf16.msra.mxu0 %v386
      %455 = vmatpush.bf16.msra.mxu0 %v383
      %456 = vmatmul.bf16.gmra.mxu0 %v410
      %v457 = vpop.f32.mrf.mxu0
      %v458 = vadd.f32 0.0, %v457
      %v459 = vpop.f32.mrf.mxu0
      %460 = vdwg.mxu0
      %462 = vset.pattern.permute.xlu0 0
      %463 = vperm.xlu0 %462, %v205
      %v464 = vpop.permute.xlu0 %463
      %v466 = vmul.f32 %v432, %v464
      %v467 = vmul.f32 %v445, %v464
      %v468 = vmul.f32 %v458, %v464
      %469 = vset.pattern.permute.xlu0 1
      %470 = vperm.xlu0 %469, %v205
      %v471 = vpop.permute.xlu0 %470
      %v473 = vadd.f32 %v466, %v471
      %v474 = vadd.f32 %v467, %v471
      %v475 = vadd.f32 %v468, %v471
      %v476 = vmax.f32 %v473, 0.0
      %v477 = vmax.f32 %v474, 0.0
      %v478 = vmax.f32 %v475, 0.0
      %vm479 = vcmask 150528
      %480 = vst.msk [vmem:[#allocation3] sm:$0xf] %vm479, 0
      %vm481 = vcmask 699800
      %482 = vst.msk [vmem:[#allocation3 + $0x8] sm:$0xf] %vm481, 0
      %v484 = vperm.slane %v204, 0
      %v485 = vperm.slane %v204, 1
      %v486 = vperm.slane %v204, 2
      %v490 = vmul.f32 %v476, %v484
      %v491 = vmul.f32 %v477, %v485
      %v492 = vmul.f32 %v478, %v486
      %v493 = vpack.c.bf16 %v491, %v490
      %v494 = vpack.c.bf16 %v492, %v492
      %497 = vrot.lane.b32.xlu0 %v493, 19
      %v498 = vpop.permute.xlu0 %497
      %499 = vrot.lane.b32.xlu0 %v494, 19
      %v500 = vpop.permute.xlu0 %499
      %v501 = vrot.slane %v498, 4
      %vm502 = vcmask 154624
      %v503 = vsel %vm502, %v501, %v498
      %v504 = vsel %vm502, %v501, %v500
      %vm507 = vcmask 1043608
      %vm508 = vcmask 1047556
      %vm509 = vmor %vm508, %vm507
      %510 = vst.msk [vmem:[#allocation3] sm:$0xff] %vm509, %v503
      %vm511 = vcmask 412672
      %512 = vst.msk [vmem:[#allocation3 + $0x8] sm:$0xf] %vm511, %v504
      %v513 = vld [vmem:[#allocation3] sm:$0xff]
      %v514 = vld [vmem:[#allocation3 + $0x8] sm:$0xf]
      %515 = vst [vmem:[#allocation2] sm:$0xff] %v513
      %516 = vst.msk [vmem:[#allocation2 + $0x8] sm:$0xf] %vm208, %v514
      %519 = vrot.lane.b32.xlu0 %v513, 127
      %v520 = vpop.permute.xlu0 %519
      %521 = vrot.lane.b32.xlu0 %v514, 127
      %v522 = vpop.permute.xlu0 %521
      %v523 = vrot.slane %v520, 4
      %v524 = vrot.slane %v522, 4
      %v525 = vsel %vm218, %v523, %v524
      %v526 = vsel %vm220, %v520, %v525
      %529 = vst [vmem:[#allocation2 + $0xc] sm:$0xff] %v526
      %530 = vst.msk [vmem:[#allocation2 + $0x14] sm:$0xf] %vm208, %v522
      %531 = vrot.lane.b32.xlu0 %v513, 126
      %v532 = vpop.permute.xlu0 %531
      %533 = vrot.lane.b32.xlu0 %v514, 126
      %v534 = vpop.permute.xlu0 %533
      %v535 = vrot.slane %v532, 4
      %v536 = vrot.slane %v534, 4
      %v537 = vsel %vm218, %v535, %v536
      %v538 = vsel %vm233, %v532, %v537
      %541 = vst [vmem:[#allocation2 + $0x18] sm:$0xff] %v538
      %542 = vst.msk [vmem:[#allocation2 + $0x20] sm:$0xf] %vm208, %v534
      %543 = vrot.lane.b32.xlu0 %v513, 110
      %v544 = vpop.permute.xlu0 %543
      %545 = vrot.lane.b32.xlu0 %v514, 110
      %v546 = vpop.permute.xlu0 %545
      %v547 = vrot.slane %v544, 4
      %v548 = vrot.slane %v546, 4
      %v549 = vsel %vm218, %v547, %v548
      %v550 = vsel %vm246, %v544, %v549
      %553 = vst [vmem:[#allocation2 + $0x24] sm:$0xff] %v550
      %554 = vst.msk [vmem:[#allocation2 + $0x2c] sm:$0xf] %vm208, %v546
      %555 = vrot.lane.b32.xlu0 %v513, 109
      %v556 = vpop.permute.xlu0 %555
      %557 = vrot.lane.b32.xlu0 %v514, 109
      %v558 = vpop.permute.xlu0 %557
      %v559 = vrot.slane %v556, 4
      %v560 = vrot.slane %v558, 4
      %v561 = vsel %vm218, %v559, %v560
      %v562 = vsel %vm259, %v556, %v561
      %565 = vst [vmem:[#allocation2 + $0x30] sm:$0xff] %v562
      %566 = vst.msk [vmem:[#allocation2 + $0x38] sm:$0xf] %vm208, %v558
      %567 = vrot.lane.b32.xlu0 %v513, 108
      %v568 = vpop.permute.xlu0 %567
      %569 = vrot.lane.b32.xlu0 %v514, 108
      %v570 = vpop.permute.xlu0 %569
      %v571 = vrot.slane %v568, 4
      %v572 = vrot.slane %v570, 4
      %v573 = vsel %vm218, %v571, %v572
      %v574 = vsel %vm272, %v568, %v573
      %577 = vst [vmem:[#allocation2 + $0x3c] sm:$0xff] %v574
      %578 = vst.msk [vmem:[#allocation2 + $0x44] sm:$0xf] %vm208, %v570
      %579 = vrot.lane.b32.xlu0 %v513, 92
      %v580 = vpop.permute.xlu0 %579
      %581 = vrot.lane.b32.xlu0 %v514, 92
      %v582 = vpop.permute.xlu0 %581
      %v583 = vrot.slane %v580, 4
      %v584 = vrot.slane %v582, 4
      %v585 = vsel %vm218, %v583, %v584
      %v586 = vsel %vm285, %v580, %v585
      %589 = vst [vmem:[#allocation2 + $0x48] sm:$0xff] %v586
      %590 = vst.msk [vmem:[#allocation2 + $0x50] sm:$0xf] %vm208, %v582
      %591 = vrot.lane.b32.xlu0 %v513, 91
      %v592 = vpop.permute.xlu0 %591
      %593 = vrot.lane.b32.xlu0 %v514, 91
      %v594 = vpop.permute.xlu0 %593
      %v595 = vrot.slane %v592, 4
      %v596 = vrot.slane %v594, 4
      %v597 = vsel %vm218, %v595, %v596
      %v598 = vsel %vm298, %v592, %v597
      %601 = vst [vmem:[#allocation2 + $0x54] sm:$0xff] %v598
      %602 = vst.msk [vmem:[#allocation2 + $0x5c] sm:$0xf] %vm208, %v594
      %603 = vrot.lane.b32.xlu0 %v513, 90
      %v604 = vpop.permute.xlu0 %603
      %605 = vrot.lane.b32.xlu0 %v514, 90
      %v606 = vpop.permute.xlu0 %605
      %v607 = vrot.slane %v604, 4
      %v608 = vrot.slane %v606, 4
      %v609 = vsel %vm218, %v607, %v608
      %v610 = vsel %vm311, %v604, %v609
      %613 = vst [vmem:[#allocation2 + $0x60] sm:$0xff] %v610
      %614 = vst.msk [vmem:[#allocation2 + $0x68] sm:$0xf] %vm208, %v606
      %s615 = scalar_lea.vmem %s2, 4
      %v616 = vld [vmem:[%s615] sm:$0xf]
      %v617 = vld [vmem:[#allocation2] sm:$0xff]
      %v618 = vld [vmem:[#allocation2 + $0x8] sm:$0xf]
      %v619 = vld [vmem:[#allocation2 + $0xc] sm:$0xff]
      %v620 = vld [vmem:[#allocation2 + $0x14] sm:$0xf]
      %v621 = vld [vmem:[#allocation2 + $0x18] sm:$0xff]
      %v622 = vld [vmem:[#allocation2 + $0x20] sm:$0xf]
      %v623 = vld [vmem:[#allocation2 + $0x24] sm:$0xff]
      %v624 = vld [vmem:[#allocation2 + $0x2c] sm:$0xf]
      %v625 = vld [vmem:[#allocation2 + $0x30] sm:$0xff]
      %v626 = vld [vmem:[#allocation2 + $0x38] sm:$0xf]
      %v627 = vld [vmem:[#allocation2 + $0x3c] sm:$0xff]
      %v628 = vld [vmem:[#allocation2 + $0x44] sm:$0xf]
      %v629 = vld [vmem:[#allocation2 + $0x48] sm:$0xff]
      %v630 = vld [vmem:[#allocation2 + $0x50] sm:$0xf]
      %v631 = vld [vmem:[#allocation2 + $0x54] sm:$0xff]
      %v632 = vld [vmem:[#allocation2 + $0x5c] sm:$0xf]
      %v633 = vld [vmem:[#allocation2 + $0x60] sm:$0xff]
      %v634 = vld [vmem:[#allocation2 + $0x68] sm:$0xf]
      %v653 = vunpack.c.l.b16 %v617
      %v654 = vunpack.c.h.b16 %v617
      %v655 = vunpack.c.l.b16 %v618
      %v656 = vunpack.c.l.b16 %v619
      %v657 = vunpack.c.h.b16 %v619
      %v658 = vunpack.c.l.b16 %v620
      %v659 = vunpack.c.l.b16 %v621
      %v660 = vunpack.c.h.b16 %v621
      %v661 = vunpack.c.l.b16 %v622
      %v662 = vunpack.c.l.b16 %v623
      %v663 = vunpack.c.h.b16 %v623
      %v664 = vunpack.c.l.b16 %v624
      %v665 = vunpack.c.l.b16 %v625
      %v666 = vunpack.c.h.b16 %v625
      %v667 = vunpack.c.l.b16 %v626
      %v668 = vunpack.c.l.b16 %v627
      %v669 = vunpack.c.h.b16 %v627
      %v670 = vunpack.c.l.b16 %v628
      %v671 = vunpack.c.l.b16 %v629
      %v672 = vunpack.c.h.b16 %v629
      %v673 = vunpack.c.l.b16 %v630
      %v674 = vunpack.c.l.b16 %v631
      %v675 = vunpack.c.h.b16 %v631
      %v676 = vunpack.c.l.b16 %v632
      %v677 = vunpack.c.l.b16 %v633
      %v678 = vunpack.c.h.b16 %v633
      %v679 = vunpack.c.l.b16 %v634
      %v680 = vpack.c.b16 %v656, %v653
      %v681 = vpack.c.b16 %v657, %v654
      %v682 = vpack.c.b16 %v658, %v655
      %v683 = vpack.c.b16 %v662, %v659
      %v684 = vpack.c.b16 %v663, %v660
      %v685 = vpack.c.b16 %v664, %v661
      %v686 = vpack.c.b16 %v668, %v665
      %v687 = vpack.c.b16 %v669, %v666
      %v688 = vpack.c.b16 %v670, %v667
      %v689 = vpack.c.b16 %v674, %v671
      %v690 = vpack.c.b16 %v675, %v672
      %v691 = vpack.c.b16 %v676, %v673
      %v692 = vpack.c.b16 %v677, %v677
      %v693 = vpack.c.b16 %v678, %v678
      %v694 = vpack.c.b16 %v679, %v679
      %v708 = vsel %vm408, %v616, 0
      %v711 = vsel %vm412, %v692, 0
      %v714 = vsel %vm412, %v693, 0
      %v717 = vsel %vm412, %v694, 0
      %719 = vmatpush.bf16.msra.mxu0 0
      %720 = vmatpush.bf16.msra.mxu0 0
      %721 = vmatpush.bf16.msra.mxu0 0
      %722 = vmatpush.bf16.msra.mxu0 %v711
      %723 = vmatpush.bf16.msra.mxu0 %v689
      %724 = vmatpush.bf16.msra.mxu0 %v686
      %725 = vmatpush.bf16.msra.mxu0 %v683
      %726 = vmatpush.bf16.msra.mxu0 %v680
      %727 = vmatmul.bf16.gmra.mxu0 %v708
      %v728 = vpop.f32.mrf.mxu0
      %v729 = vadd.f32 0.0, %v728
      %v730 = vpop.f32.mrf.mxu0
      %731 = vdwg.mxu0
      %732 = vmatpush.bf16.msra.mxu0 0
      %733 = vmatpush.bf16.msra.mxu0 0
      %734 = vmatpush.bf16.msra.mxu0 0
      %735 = vmatpush.bf16.msra.mxu0 %v714
      %736 = vmatpush.bf16.msra.mxu0 %v690
      %737 = vmatpush.bf16.msra.mxu0 %v687
      %738 = vmatpush.bf16.msra.mxu0 %v684
      %739 = vmatpush.bf16.msra.mxu0 %v681
      %740 = vmatmul.bf16.gmra.mxu0 %v708
      %v741 = vpop.f32.mrf.mxu0
      %v742 = vadd.f32 0.0, %v741
      %v743 = vpop.f32.mrf.mxu0
      %744 = vdwg.mxu0
      %745 = vmatpush.bf16.msra.mxu0 0
      %746 = vmatpush.bf16.msra.mxu0 0
      %747 = vmatpush.bf16.msra.mxu0 0
      %748 = vmatpush.bf16.msra.mxu0 %v717
      %749 = vmatpush.bf16.msra.mxu0 %v691
      %750 = vmatpush.bf16.msra.mxu0 %v688
      %751 = vmatpush.bf16.msra.mxu0 %v685
      %752 = vmatpush.bf16.msra.mxu0 %v682
      %753 = vmatmul.bf16.gmra.mxu0 %v708
      %v754 = vpop.f32.mrf.mxu0
      %v755 = vadd.f32 0.0, %v754
      %v756 = vpop.f32.mrf.mxu0
      %757 = vdwg.mxu0
      %758 = vset.pattern.permute.xlu0 2
      %759 = vperm.xlu0 %758, %v205
      %v760 = vpop.permute.xlu0 %759
      %v762 = vmul.f32 %v729, %v760
      %v763 = vmul.f32 %v742, %v760
      %v764 = vmul.f32 %v755, %v760
      %765 = vset.pattern.permute.xlu0 3
      %766 = vperm.xlu0 %765, %v205
      %v767 = vpop.permute.xlu0 %766
      %v769 = vadd.f32 %v762, %v767
      %v770 = vadd.f32 %v763, %v767
      %v771 = vadd.f32 %v764, %v767
      %v772 = vmul.f32 %v769, %v484
      %v773 = vmul.f32 %v770, %v485
      %v774 = vmul.f32 %v771, %v486
      %v775 = vadd.f32 %v772, %v773
      %vm776 = vcmask 261120
      %v777 = vsel %vm776, %v774, 0.0
      %v778 = vadd.f32 %v775, %v777
      %779 = vadd.xlane.f32.xlu0 %v778
      %v780 = vpop.xlane.xlu0 %779
      %v781 = vmul.f32 %v780, 0.00390625
      %v782 = vmul.f32 %v205, %v781
      %vm783 = vcmask 56360
      %v784 = vsel %vm783, %v782, 0.0
      %v785 = vrot.slane %v784, 4
      %v786 = vadd.f32 %v784, %v785
      %v787 = vrot.slane %v786, 2
      %v788 = vadd.f32 %v786, %v787
      %v789 = vrot.slane %v788, 1
      %v790 = vadd.f32 %v788, %v789
      %792 = vrot.lane.b32.xlu0 %v206, 124
      %v793 = vpop.permute.xlu0 %792
      %v795 = vadd.f32 %v790, %v793
      %v796 = vmax.f32 %v795, 0.0
      %v797 = vperm.slane %v796, 0
      %799 = vrot.lane.b32.xlu0 %v797, 2
      %v800 = vpop.permute.xlu0 %799
      %v802 = vmul.f32 %v205, %v800
      %804 = vrot.lane.b32.xlu0 %v802, 121
      %v805 = vpop.permute.xlu0 %804
      %vm807 = vcmask 15360
      %v808 = vsel %vm807, %v805, 0.0
      %809 = vadd.xlane.f32.xlu0 %v808
      %v810 = vpop.xlane.xlu0 %809
      %v811 = vadd.f32 %v810, %v205
      %v812 = vxor.u32 %v811, 2147483648
      %v813 = vmul.f32 %v812, 1.442695
      %v814 = vpow.pop %v813
      %v815 = vadd.f32 %v814, 1.0
      %v816 = vrcp.pop %v815
      %v817 = vmul.f32 %v815, %v816
      %v818 = vsub.f32 1.0, %v817
      %v819 = vmul.f32 %v816, %v818
      %v820 = vadd.f32 %v816, %v819
      %vm821 = vweird.f32 %v815
      %vm822 = vweird.f32 %v816
      %vm823 = vmor %vm821, %vm822
      %v824 = vsel %vm823, %v816, %v820
      %v825 = vand.u32 2147483647, %v815
      %vm826 = vcmp.eq.f32.partialorder %v825, 8.507059e+37
      %v827 = vand.u32 %v815, 2147483648
      %v828 = vor.u32 1.1754944e-38, %v827
      %v829 = vsel %vm826, %v828, %v824
      %v830 = vmul.f32 1.0, %v829
      %832 = vset.pattern.permute.xlu0 4
      %833 = vperm.xlu0 %832, %v830
      %v834 = vpop.permute.xlu0 %833
      %v836 = vmul.f32 %v769, %v834
      %v837 = vmul.f32 %v770, %v834
      %v838 = vmul.f32 %v771, %v834
      %842 = vrot.lane.b32.xlu0 %v199, 109
      %v843 = vpop.permute.xlu0 %842
      %844 = vrot.lane.b32.xlu0 %v200, 109
      %v845 = vpop.permute.xlu0 %844
      %846 = vrot.lane.b32.xlu0 %v201, 109
      %v847 = vpop.permute.xlu0 %846
      %vm848 = vcmask 891904
      %v849 = vsel %vm848, %v843, %v845
      %v850 = vsel %vm848, %v845, %v847
      %v854 = vadd.f32 %v836, %v849
      %v855 = vadd.f32 %v837, %v850
      %v856 = vadd.f32 %v838, %v847
      %v857 = vmax.f32 %v854, 0.0
      %v858 = vmax.f32 %v855, 0.0
      %v859 = vmax.f32 %v856, 0.0
      %860 = vst [vmem:[%s197] sm:$0xff] %v857
      %861 = vst [vmem:[%s197 + $0x8] sm:$0xff] %v858
      %862 = vst.msk [vmem:[%s197 + $0x10] sm:$0xff] %vm776, %v859
      %p863 = scmp.lt.s32.totalorder %s15, 1
      %s864 = scalar_select %p863, %s15, 1
      %s865 = smul.addr %s864, 3
      %s866 = smul.addr %s865, 8
      %s867 = scalar_lea.vmem %s4, %s866
      // Predicated region
      $region37: #{basic_block_forward.1} parent=35 // pred_check
        %p868 = pneg %p122
      $region38: #{basic_block_forward.1} parent=35 // pred_check_branch
        %870 = sbr.rel (%p868) target = $region40
      $region39: #{basic_block_forward.1} parent=35 // pred_region
        _
      $region40: #{basic_block_forward.1} parent=35 // pred_fallthru
        _
    $region36: #{basic_block_forward.1} parent=5 // pred_fallthru
      _
    %p871 = scmp.le.s32.totalorder 2, %s10
    // Predicated region
    $region41: #{basic_block_forward.1} parent=5 // pred_check
      %p872 = pneg %p871
    $region42: #{basic_block_forward.1} parent=5 // pred_check_branch
      %874 = sbr.rel (%p872) target = $region44
    $region43: #{basic_block_forward.1} parent=5 // pred_region
      %s875 = ssub.s32 %s10, 2
      // Predicated region
      $region45: #{basic_block_forward.1} parent=43 // pred_check
        %p876 = pneg %p128
      $region46: #{basic_block_forward.1} parent=43 // pred_check_branch
        %878 = sbr.rel (%p876) target = $region48
      $region47: #{basic_block_forward.1} parent=43 // pred_region
        %p879 = scmp.lt.s32.totalorder %s16, 1
        %s880 = scalar_select %p879, %s16, 1
        %s881 = smul.addr %s880, 3
        %s882 = smul.addr %s881, 8
        %s883 = scalar_lea.vmem %s4, %s882
      $region48: #{basic_block_forward.1} parent=43 // pred_fallthru
        _
    $region44: #{basic_block_forward.1} parent=5 // pred_fallthru
      _
  $region6: #{basic_block_forward.1} parent=0 // loop_footer
    %s14 = sadd.s32 1, %s10
  $region7: #{basic_block_forward.1} parent=0 // loop_footer_branch
    %9 = sbr.rel target = $region3
  $region8: #{basic_block_forward.1} parent=0 // loop_exit
    _

</llo_original>
